<compile_context>
chip_gen: v7x
topology: tpu7x:2x2x1
jax: 0.10.0
libtpu: 0.0.40
codegen_flags: <defaults>
</compile_context>

<pallas_src>
import functools

import numpy as np
import jax
import jax.numpy as jnp
from jax.experimental import pallas as pl
from jax.experimental.pallas import tpu as pltpu

PIXEL_MEAN = (0.48145466, 0.4578275, 0.40821073)
PIXEL_STD = (0.26862954, 0.26130258, 0.27577711)

_PARALLEL_1D = pltpu.CompilerParams(dimension_semantics=("parallel",))


# ----------------------------------------------------------------------------
# bicubic interpolation matrix (host-side glue, cached across calls)
# ----------------------------------------------------------------------------
def _cubic_weight(x, a=-0.75):
    x = np.abs(x)
    w1 = (a + 2.0) * x**3 - (a + 3.0) * x**2 + 1.0
    w2 = a * x**3 - 5.0 * a * x**2 + 8.0 * a * x - 4.0 * a
    return np.where(x <= 1.0, w1, np.where(x < 2.0, w2, 0.0))


@functools.lru_cache(maxsize=None)
def bicubic_matrix(out_size, in_size):
    # matches F.interpolate(mode='bicubic', align_corners=False), border clamp
    W = np.zeros((out_size, in_size), np.float32)
    scale = in_size / out_size
    for i in range(out_size):
        src = (i + 0.5) * scale - 0.5
        i0 = int(np.floor(src))
        t = src - i0
        for k in range(-1, 3):
            w = float(_cubic_weight(k - t))
            idx = min(max(i0 + k, 0), in_size - 1)
            W[i, idx] += w
    return W


# ----------------------------------------------------------------------------
# Kernel 1: mask regions + valid-pixel count (lane-dense (C, H*W) layout)
# ----------------------------------------------------------------------------
def preprocess_regions(image, mask, mask_thr=0.5):
    """image: (C,H,W) f32, mask: (K,H,W) f32 logits.

    Returns:
      regions : (K, C, H*W) f32 -- image * sigmoid(100*mask_k)  (unnormalized)
      vcnt    : (K, 1, 128) f32 -- count of pixels with mask_k > mask_thr
                                   broadcast across the lane dim
    """
    C, H, W = image.shape
    K = mask.shape[0]
    HW = H * W
    image2d = image.reshape(C, HW)        # last dim 1024: lane-dense
    mask3d = mask.reshape(K, 1, HW)

    def kernel(img_ref, m_ref, region_ref, vcnt_ref):
        img = img_ref[...]                          # (C, HW)
        m = m_ref[0]                                # (1, HW)
        soft = jax.nn.sigmoid(m * 100.0)            # (1, HW)
        region_ref[0] = img * soft                  # broadcast over channels
        bin_m = (m > mask_thr).astype(jnp.float32)
        cnt = jnp.sum(bin_m, axis=(0, 1), keepdims=True)           # (1, 1)
        vcnt_ref[...] = jnp.broadcast_to(cnt.reshape(1, 1, 1), (1, 1, 128))

    out_shapes = (
        jax.ShapeDtypeStruct((K, C, HW), jnp.float32),
        jax.ShapeDtypeStruct((K, 1, 128), jnp.float32),
    )
    return pl.pallas_call(
        kernel,
        out_shape=out_shapes,
        grid=(K,),
        in_specs=[
            pl.BlockSpec((C, HW), lambda r: (0, 0)),
            pl.BlockSpec((1, 1, HW), lambda r: (r, 0, 0)),
        ],
        out_specs=(
            pl.BlockSpec((1, C, HW), lambda r: (r, 0, 0)),
            pl.BlockSpec((1, 1, 128), lambda r: (r, 0, 0)),
        ),
        compiler_params=_PARALLEL_1D,
    )(image2d, mask3d)


# ----------------------------------------------------------------------------
# Kernel 2: fused bicubic resize (Wh @ X @ Ww^T) emitting unnormalized AND
#           normalized regions (resize is linear and rows of Wh/Ww sum to 1).
# ----------------------------------------------------------------------------
def resize_and_normalize(x, Wh, Ww, mean, std):
    """x: (K,C,H,W) unnormalized regions -> (unnorm, norm), each (K,C,OH,OW)."""
    K, C, H, W = x.shape
    OH, OW = Wh.shape[0], Ww.shape[0]
    WwT = np.ascontiguousarray(Ww.T)                 # (W, OW)
    mean = [float(m) for m in mean]                  # scalar constants only
    inv_std = [1.0 / float(s) for s in std]

    def kernel(wh_ref, wwt_ref, x_ref, unnorm_ref, norm_ref):
        wh = wh_ref[...]                             # (OH, H)
        wwt = wwt_ref[...]                           # (W, OW)
        for c in range(C):                           # static unroll, C == 3
            tmp = jnp.dot(wh, x_ref[0, c], preferred_element_type=jnp.float32)
            out = jnp.dot(tmp, wwt, preferred_element_type=jnp.float32)
            unnorm_ref[0, c] = out
            norm_ref[0, c] = (out - mean[c]) * inv_std[c]

    out_shapes = (
        jax.ShapeDtypeStruct((K, C, OH, OW), jnp.float32),
        jax.ShapeDtypeStruct((K, C, OH, OW), jnp.float32),
    )
    return pl.pallas_call(
        kernel,
        out_shape=out_shapes,
        grid=(K,),
        in_specs=[
            pl.BlockSpec((OH, H), lambda r: (0, 0)),
            pl.BlockSpec((W, OW), lambda r: (0, 0)),
            pl.BlockSpec((1, C, H, W), lambda r: (r, 0, 0, 0)),
        ],
        out_specs=(
            pl.BlockSpec((1, C, OH, OW), lambda r: (r, 0, 0, 0)),
            pl.BlockSpec((1, C, OH, OW), lambda r: (r, 0, 0, 0)),
        ),
        compiler_params=_PARALLEL_1D,
    )(Wh, WwT, x)


# ----------------------------------------------------------------------------
# Kernel 3: synthetic CLIP visual head (patch embed -> mean pool -> proj -> L2)
# ----------------------------------------------------------------------------
def get_image_features(regions, w_patch, w_proj, patch):
    # TODO(synk): the real CLIP ViT backbone (transformer blocks, cls token,
    # positional embeddings) is replaced by this patch-embed + pool + proj head.
    K, C, H, W = regions.shape
    ph, pw = H // patch, W // patch
    P = ph * pw
    Kdim = C * patch * patch
    D = w_patch.shape[1]
    # im2col glue (host-side reshuffle)
    x = regions.reshape(K, C, ph, patch, pw, patch)
    x = jnp.transpose(x, (0, 2, 4, 1, 3, 5)).reshape(K, P, Kdim)

    def kernel(x_ref, wp_ref, wproj_ref, o_ref):
        h = jnp.dot(x_ref[0], wp_ref[...], preferred_element_type=jnp.float32)   # (P, D)
        pooled = jnp.mean(h, axis=0, keepdims=True)                              # (1, D)
        feat = jnp.dot(pooled, wproj_ref[...], preferred_element_type=jnp.float32)
        inv = jax.lax.rsqrt(jnp.sum(feat * feat, axis=-1, keepdims=True) + 1e-12)
        o_ref[0] = feat * inv

    out = pl.pallas_call(
        kernel,
        out_shape=jax.ShapeDtypeStruct((K, 1, D), jnp.float32),
        grid=(K,),
        in_specs=[
            pl.BlockSpec((1, P, Kdim), lambda r: (r, 0, 0)),
            pl.BlockSpec((Kdim, D), lambda r: (0, 0)),
            pl.BlockSpec((D, D), lambda r: (0, 0)),
        ],
        out_specs=pl.BlockSpec((1, 1, D), lambda r: (r, 0, 0)),
        compiler_params=_PARALLEL_1D,
    )(x, w_patch, w_proj)
    return out.reshape(K, D)


# ----------------------------------------------------------------------------
# Text features: concat(object_text, normalize(non_object_embedding))
# ----------------------------------------------------------------------------
def get_text_features(obj_text, non_object_embedding):
    # 5x128 L2-norm + concat: plain jnp -- a pallas_call launch would cost
    # more than the math itself.
    v = non_object_embedding
    v = v * jax.lax.rsqrt(jnp.sum(v * v, axis=-1, keepdims=True) + 1e-12)
    return jnp.concatenate([obj_text, v], axis=0)


# ----------------------------------------------------------------------------
# Full forward (glue around the kernels)
# ----------------------------------------------------------------------------
def focus_clip_refiner_forward(image, mask, params, resize_to=224, patch=32):
    C, H, W = image.shape
    K = mask.shape[0]

    # 1. mask regions + valid pixel counts (kernel 1)
    unnorm_flat, vcnt = preprocess_regions(image, mask)
    valid_flag = vcnt[:, 0, 0] > 0
    # TODO(synk): BitMasks bounding boxes and the data-dependent valid-mask
    # filtering / repeat branch (dynamic shapes) have no JAX/Pallas equivalent
    # and do not affect the returned tensors when both masks are valid.

    # 2. one fused bicubic resize emitting unnormalized + normalized regions
    #    (mask_prompt_fwd=False -> nearest-resized region_masks are dead work
    #     and deliberately not computed)
    Wh = bicubic_matrix(resize_to, H)
    Ww = bicubic_matrix(resize_to, W)
    mean = [255.0 * m for m in PIXEL_MEAN]
    std = [255.0 * s for s in PIXEL_STD]
    unnorm_regions, regions = resize_and_normalize(
        unnorm_flat.reshape(K, C, H, W), Wh, Ww, mean, std)

    # 3. image features (kernel 3)
    image_features = get_image_features(
        regions, params["w_patch"], params["w_proj"], patch)

    # 4. text features
    text_features = get_text_features(
        params["object_text_features"], params["non_object_embedding"])
    return text_features, image_features, unnorm_regions, valid_flag


if __name__ == "__main__":
    key = jax.random.PRNGKey(0)
    k_img, k_mask, k_wp, k_proj, k_text, k_non = jax.random.split(key, 6)

    C, H, W = 3, 32, 32     # small input image
    K = 2                   # foreground / background masks
    D = 128                 # synthetic CLIP embed width (lane-dense)
    T = 4                   # number of text prompts
    RESIZE = 224            # module hardcodes 224x224
    PATCH = 32

    image = jax.random.uniform(k_img, (C, H, W), jnp.float32) * 255.0
    # mask logits in [-0.5, 1.5] -> both masks have pixels above 0.5 threshold
    mask = jax.random.uniform(k_mask, (K, H, W), jnp.float32) * 2.0 - 0.5

    kdim = C * PATCH * PATCH
    obj_text = jax.random.normal(k_text, (T, D), jnp.float32)
    obj_text = obj_text / jnp.linalg.norm(obj_text, axis=-1, keepdims=True)
    params = {
        "w_patch": jax.random.normal(k_wp, (kdim, D), jnp.float32) * kdim ** -0.5,
        "w_proj": jax.random.normal(k_proj, (D, D), jnp.float32) * D ** -0.5,
        "object_text_features": obj_text,
        # nn.init.normal_(std = transformer.width ** -0.5), synthetic width = D
        "non_object_embedding": jax.random.normal(k_non, (1, D), jnp.float32) * D ** -0.5,
    }

    out = focus_clip_refiner_forward(image, mask, params, RESIZE, PATCH)
    out = jax.block_until_ready(out)
    text_features, image_features, unnorm_regions, valid_flag = out
    assert text_features.shape == (T + 1, D)
    assert image_features.shape == (K, D)
    assert unnorm_regions.shape == (K, C, RESIZE, RESIZE)
    assert valid_flag.shape == (K,)
    assert bool(valid_flag[0]) and bool(valid_flag[1])
    print("KERNEL_OK")
</pallas_src>

<mosaic_0001>
module attributes {stable_mosaic.version = 11 : i64} {
  func.func @kernel(%arg0: i32, %arg1: memref<3x1024xf32, #tpu.memory_space<vmem>>, %arg2: memref<1x1x1024xf32, #tpu.memory_space<vmem>>, %arg3: memref<1x3x1024xf32, #tpu.memory_space<vmem>>, %arg4: memref<1x1x128xf32, #tpu.memory_space<vmem>>) attributes {dimension_semantics = [#tpu.dimension_semantics<parallel>], iteration_bounds = array<i64: 2>, scalar_prefetch = 0 : i64, scratch_operands = 0 : i64, tpu.core_type = #tpu.core_type<tc>, window_params = [{pipeline_mode = #tpu.pipeline_mode<synchronous>, transform_indices = @transform_0, window_bounds = array<i64: 3, 1024>}, {transform_indices = @transform_1, window_bounds = array<i64: 1, 1, 1024>}, {transform_indices = @transform_2, window_bounds = array<i64: 1, 3, 1024>}, {transform_indices = @transform_3, window_bounds = array<i64: 1, 1, 128>}]} {
    %c0 = arith.constant 0 : index
    %c0_0 = arith.constant 0 : index
    %0 = vector.load %arg1[%c0, %c0_0] : memref<3x1024xf32, #tpu.memory_space<vmem>>, vector<3x1024xf32>
    %c0_1 = arith.constant 0 : index
    %c0_2 = arith.constant 0 : index
    %c0_3 = arith.constant 0 : index
    %1 = vector.load %arg2[%c0_1, %c0_2, %c0_3] : memref<1x1x1024xf32, #tpu.memory_space<vmem>>, vector<1x1x1024xf32>
    %2 = vector.shape_cast %1 : vector<1x1x1024xf32> to vector<1x1024xf32>
    %cst = arith.constant 1.000000e+02 : f32
    %3 = vector.broadcast %cst : f32 to vector<1x1024xf32>
    %4 = arith.mulf %2, %3 : vector<1x1024xf32>
    %5 = arith.negf %4 : vector<1x1024xf32>
    %6 = math.exp %5 : vector<1x1024xf32>
    %cst_4 = arith.constant 1.000000e+00 : f32
    %7 = vector.broadcast %cst_4 : f32 to vector<1x1024xf32>
    %8 = arith.addf %7, %6 : vector<1x1024xf32>
    %9 = arith.divf %7, %8 : vector<1x1024xf32>
    %10 = vector.broadcast %9 : vector<1x1024xf32> to vector<3x1024xf32>
    %11 = arith.mulf %0, %10 : vector<3x1024xf32>
    %c0_5 = arith.constant 0 : index
    %c0_6 = arith.constant 0 : index
    %c0_7 = arith.constant 0 : index
    %12 = vector.load %arg3[%c0_5, %c0_6, %c0_7] : memref<1x3x1024xf32, #tpu.memory_space<vmem>>, vector<1x3x1024xf32>
    %13 = vector.shape_cast %12 : vector<1x3x1024xf32> to vector<3x1024xf32>
    %14 = vector.shape_cast %11 : vector<3x1024xf32> to vector<1x3x1024xf32>
    tpu.vector_store %arg3[%c0_5, %c0_6, %c0_7], %14 {strides = array<i32>} : memref<1x3x1024xf32, #tpu.memory_space<vmem>>, vector<1x3x1024xf32>,
    %cst_8 = arith.constant 5.000000e-01 : f32
    %15 = vector.broadcast %cst_8 : f32 to vector<1x1024xf32>
    %16 = arith.cmpf ogt, %2, %15 : vector<1x1024xf32>
    %17 = arith.extui %16 : vector<1x1024xi1> to vector<1x1024xi32>
    %18 = arith.sitofp %17 : vector<1x1024xi32> to vector<1x1024xf32>
    %19 = vector.shape_cast %18 : vector<1x1024xf32> to vector<1x1x1024xf32>
    %cst_9 = arith.constant dense<0.000000e+00> : vector<1xf32>
    %20 = vector.multi_reduction <add>, %19, %cst_9 [1, 2] : vector<1x1x1024xf32> to vector<1xf32>
    %21 = vector.shape_cast %20 : vector<1xf32> to vector<1x1x1xf32>
    %22 = vector.extract %21[0, 0, 0] : f32 from vector<1x1x1xf32>
    %23 = vector.broadcast %22 : f32 to vector<1x1xf32>
    %24 = vector.shape_cast %23 : vector<1x1xf32> to vector<1x1x1xf32>
    %25 = vector.shape_cast %24 : vector<1x1x1xf32> to vector<1x1x1xf32>
    %26 = vector.broadcast %25 : vector<1x1x1xf32> to vector<1x1x128xf32>
    %c0_10 = arith.constant 0 : index
    %c0_11 = arith.constant 0 : index
    %c0_12 = arith.constant 0 : index
    %27 = vector.load %arg4[%c0_10, %c0_11, %c0_12] : memref<1x1x128xf32, #tpu.memory_space<vmem>>, vector<1x1x128xf32>
    tpu.vector_store %arg4[%c0_10, %c0_11, %c0_12], %26 {strides = array<i32>} : memref<1x1x128xf32, #tpu.memory_space<vmem>>, vector<1x1x128xf32>,
    return
  }
  func.func @transform_0(%arg0: i32) -> (i32, i32) {
    %c0_i32 = arith.constant 0 : i32
    %c0_i32_0 = arith.constant 0 : i32
    %c0_i32_1 = arith.constant 0 : i32
    return %c0_i32, %c0_i32_0 : i32, i32
  }
  func.func @transform_1(%arg0: i32) -> (i32, i32, i32) {
    %c0_i32 = arith.constant 0 : i32
    %c0_i32_0 = arith.constant 0 : i32
    %c0_i32_1 = arith.constant 0 : i32
    return %arg0, %c0_i32, %c0_i32_0 : i32, i32, i32
  }
  func.func @transform_2(%arg0: i32) -> (i32, i32, i32) {
    %c0_i32 = arith.constant 0 : i32
    %c0_i32_0 = arith.constant 0 : i32
    %c0_i32_1 = arith.constant 0 : i32
    return %arg0, %c0_i32, %c0_i32_0 : i32, i32, i32
  }
  func.func @transform_3(%arg0: i32) -> (i32, i32, i32) {
    %c0_i32 = arith.constant 0 : i32
    %c0_i32_0 = arith.constant 0 : i32
    %c0_i32_1 = arith.constant 0 : i32
    return %arg0, %c0_i32, %c0_i32_0 : i32, i32, i32
  }
}

</mosaic_0001>

<llo_original>
// kernel: tpu_custom_call.1
$region0: #{tpu_custom_call.1}
  #allocation0 [shape = 'u32[]', space=smem, size = 0x4, offset = 0x4, fixed_abs, tag = 'smem constant byte address 0x4 - core index']
  #allocation1 [shape = 'u32[144,128]{1,0:T(1,128)}', space=vmem, size = 0x12000, scoped, tag = 'internal scratch']
  %s0 = inlined_call_operand.hbm [shape: f32[3,1024], index: 0, kind: input, shape index: {}]
  %s1 = inlined_call_operand.hbm [shape: f32[2,1,1024], index: 1, kind: input, shape index: {}]
  %s2 = inlined_call_operand.vmem [shape: f32[2,3,1024], index: 2, kind: output, shape index: {0}]
  %s3 = inlined_call_operand.hbm [shape: f32[2,1,128], index: 3, kind: output, shape index: {1}]
  %4 = xla_tuple %s2, %s3
  %s5 = sld [smem:[#allocation0]]
  $region57: #{tpu_custom_call.1} parent=0
    _
  %s7 = ssub.s32 1, %s5
  %s8 = scalar_select 0, %s7, %s5
  $region1: #{tpu_custom_call.1} parent=0
    #allocation2 [shape = 'u8[16384]{0}', space=vmem, size = 0x4000, scoped, tag = 'input window, operand 0, single buffered']
    #allocation3 [shape = 's32[2]{0}', space=sflag, size = 0x8, scoped, tag = 'scoped memory for tpu_custom_call.1']
    #allocation4 [shape = 's32[2]{0}', space=sflag, size = 0x8, scoped, tag = 'scoped memory for tpu_custom_call.1']
    #allocation5 [shape = 'u8[8192]{0}', space=vmem, size = 0x2000, scoped, tag = 'input window, operand 1']
    #allocation6 [shape = 's32[2]{0}', space=sflag, size = 0x8, scoped, tag = 'scoped memory for tpu_custom_call.1']
    #allocation7 [shape = 'u8[1024]{0}', space=vmem, size = 0x400, scoped, tag = 'output window, operand 1']
    %9 = vsyncpa [#allocation3], 0
    %10 = vsyncpa [#allocation6], 0
    %s11 = scalar_lea.sflag [#allocation6], 1
    %12 = vsyncpa %s11, 0
    %13 = vsyncpa [#allocation4], 0
    %s14 = scalar_lea.sflag [#allocation4], 1
    %15 = vsyncpa %s14, 0
    loop: start=0, step=1, limit=4
    $region2: #{tpu_custom_call.1} parent=1 // loop_pre_header
      _
    $region3: #{tpu_custom_call.1} parent=1 // loop_header
      %s17 = sphi 0, %s21
      %p18 = scmp.ge.s32.totalorder %s17, 4
      %s25 = sphi 0, %s25
      %s27 = sphi 0, %s25
      %s28 = sphi 0, %s27
      %s42 = sphi 0, %s28
      %s48 = sphi 0, %s50
      %s51 = sphi 0, %s48
      %s52 = sphi 0, %s51
      %s68 = sphi 0, %s52
      %s74 = sphi 0, %s76
      %s77 = sphi 0, %s74
      %s78 = sphi 0, %s77
      %s94 = sphi 0, %s78
      %s100 = sphi 0, %s102
      %s103 = sphi 0, %s100
      %s104 = sphi 0, %s103
      %s120 = sphi 0, %s104
    $region4: #{tpu_custom_call.1} parent=1 // loop_header_branch
      %20 = sbr.rel (%p18) target = $region8
    $region5: #{tpu_custom_call.1} parent=1 // loop_body
      %s22 = ssub.s32 %s17, 1
      %s23 = ssub.s32 %s17, 2
      %s24 = sadd.s32 %s17, 1
      %s26 = sadd.s32 %s25, 1
      %p29 = scmp.eq.s32.totalorder %s17, 1
      %p30 = scmp.ne.s32.totalorder %s25, %s27
      %p31 = scmp.eq.s32.totalorder %s17, 0
      %p32 = por %p30, %p31
      %p33 = scmp.ne.s32.totalorder %s25, %s27
      %p34 = scmp.eq.s32.totalorder %s22, 1
      %p35 = por %p33, %p34
      %p36 = scmp.ne.s32.totalorder %s27, %s28
      %p37 = scmp.eq.s32.totalorder %s22, 0
      %p38 = por %p36, %p37
      %p39 = scmp.ne.s32.totalorder %s27, %s28
      %p40 = scmp.eq.s32.totalorder %s23, 1
      %p41 = por %p39, %p40
      %p43 = scmp.ne.s32.totalorder %s28, %s42
      %p44 = scmp.eq.s32.totalorder %s23, 0
      %p45 = por %p43, %p44
      %s46 = ssub.s32 %s17, %s24
      %p47 = scmp.eq.s32.totalorder %s46, 0
      %s49 = sadd.s32 %s48, 1
      %s50 = scalar_select %p47, %s48, %s49
      %p53 = pneg %p47
      %p54 = scmp.eq.s32.totalorder %s17, 1
      %p55 = por %p53, %p54
      %p56 = scmp.ne.s32.totalorder %s48, %s51
      %p57 = scmp.eq.s32.totalorder %s17, 0
      %p58 = por %p56, %p57
      %p59 = scmp.ne.s32.totalorder %s48, %s51
      %p60 = scmp.eq.s32.totalorder %s22, 1
      %p61 = por %p59, %p60
      %p62 = scmp.ne.s32.totalorder %s51, %s52
      %p63 = scmp.eq.s32.totalorder %s22, 0
      %p64 = por %p62, %p63
      %p65 = scmp.ne.s32.totalorder %s51, %s52
      %p66 = scmp.eq.s32.totalorder %s23, 1
      %p67 = por %p65, %p66
      %p69 = scmp.ne.s32.totalorder %s52, %s68
      %p70 = scmp.eq.s32.totalorder %s23, 0
      %p71 = por %p69, %p70
      %s72 = ssub.s32 %s17, %s24
      %p73 = scmp.eq.s32.totalorder %s72, 0
      %s75 = sadd.s32 %s74, 1
      %s76 = scalar_select %p73, %s74, %s75
      %p79 = pneg %p73
      %p80 = scmp.eq.s32.totalorder %s17, 1
      %p81 = por %p79, %p80
      %p82 = scmp.ne.s32.totalorder %s74, %s77
      %p83 = scmp.eq.s32.totalorder %s17, 0
      %p84 = por %p82, %p83
      %p85 = scmp.ne.s32.totalorder %s74, %s77
      %p86 = scmp.eq.s32.totalorder %s22, 1
      %p87 = por %p85, %p86
      %p88 = scmp.ne.s32.totalorder %s77, %s78
      %p89 = scmp.eq.s32.totalorder %s22, 0
      %p90 = por %p88, %p89
      %p91 = scmp.ne.s32.totalorder %s77, %s78
      %p92 = scmp.eq.s32.totalorder %s23, 1
      %p93 = por %p91, %p92
      %p95 = scmp.ne.s32.totalorder %s78, %s94
      %p96 = scmp.eq.s32.totalorder %s23, 0
      %p97 = por %p95, %p96
      %s98 = ssub.s32 %s17, %s24
      %p99 = scmp.eq.s32.totalorder %s98, 0
      %s101 = sadd.s32 %s100, 1
      %s102 = scalar_select %p99, %s100, %s101
      %p105 = pneg %p99
      %p106 = scmp.eq.s32.totalorder %s17, 1
      %p107 = por %p105, %p106
      %p108 = scmp.ne.s32.totalorder %s100, %s103
      %p109 = scmp.eq.s32.totalorder %s17, 0
      %p110 = por %p108, %p109
      %p111 = scmp.ne.s32.totalorder %s100, %s103
      %p112 = scmp.eq.s32.totalorder %s22, 1
      %p113 = por %p111, %p112
      %p114 = scmp.ne.s32.totalorder %s103, %s104
      %p115 = scmp.eq.s32.totalorder %s22, 0
      %p116 = por %p114, %p115
      %p117 = scmp.ne.s32.totalorder %s103, %s104
      %p118 = scmp.eq.s32.totalorder %s23, 1
      %p119 = por %p117, %p118
      %p121 = scmp.ne.s32.totalorder %s104, %s120
      %p122 = scmp.eq.s32.totalorder %s23, 0
      %p123 = por %p121, %p122
      %p124 = scmp.le.s32.totalorder 1, %s17
      %p125 = scmp.lt.s32.totalorder %s17, 3
      %p126 = pnand %p124, %p125
      %p127 = pneg %p126
      // Predicated region
      $region9: #{tpu_custom_call.1} parent=5 // pred_check
        _
      $region10: #{tpu_custom_call.1} parent=5 // pred_check_branch
        %129 = sbr.rel (%p126) target = $region12
      $region11: #{tpu_custom_call.1} parent=5 // pred_region
        %s130 = ssub.s32 %s17, 1
        // Predicated region
        $region13: #{tpu_custom_call.1} parent=11 // pred_check
          %p131 = pneg %p38
        $region14: #{tpu_custom_call.1} parent=11 // pred_check_branch
          %133 = sbr.rel (%p131) target = $region16
        $region15: #{tpu_custom_call.1} parent=11 // pred_region
          %s135 = ssub.s32 512, 512
          %136 = vsyncadd [#allocation3], %s135
          %s138 = sshll.u32 [#allocation2], 4
          %s139 = int_to_ptr.vmem [resolvable:$true] %s138
          %141 = dma.hbm_to_vmem [thread:$0]  %s0, 512, %s139, [#allocation3]
        $region16: #{tpu_custom_call.1} parent=11 // pred_fallthru
          _
      $region12: #{tpu_custom_call.1} parent=5 // pred_fallthru
        _
      %p142 = scmp.lt.s32.totalorder %s17, 2
      // Predicated region
      $region17: #{tpu_custom_call.1} parent=5 // pred_check
        %p143 = pneg %p142
      $region18: #{tpu_custom_call.1} parent=5 // pred_check_branch
        %145 = sbr.rel (%p143) target = $region20
      $region19: #{tpu_custom_call.1} parent=5 // pred_region
        // Predicated region
        $region21: #{tpu_custom_call.1} parent=19 // pred_check
          %p146 = pneg %p58
        $region22: #{tpu_custom_call.1} parent=19 // pred_check_branch
          %148 = sbr.rel (%p146) target = $region24
        $region23: #{tpu_custom_call.1} parent=19 // pred_region
          %s149 = sand.u32 %s48, 1
          %s150 = scalar_lea.sflag [#allocation6], %s149
          %s151 = sand.u32 %s48, 1
          %s152 = smul.addr %s151, 8
          %s153 = scalar_lea.vmem [#allocation5], %s152
          %s155 = ssub.s32 128, 128
          %156 = vsyncadd %s150, %s155
          %s157 = smul.addr %s17, 8
          %s158 = smul.addr %s157, 16
          %s159 = scalar_lea.hbm %s1, %s158
          %s161 = sshll.u32 %s153, 4
          %s162 = int_to_ptr.vmem [resolvable:$true] %s161
          %164 = dma.hbm_to_vmem [thread:$0]  %s159, 128, %s162, %s150
        $region24: #{tpu_custom_call.1} parent=19 // pred_fallthru
          _
      $region20: #{tpu_custom_call.1} parent=5 // pred_fallthru
        _
      %p165 = scmp.le.s32.totalorder 1, %s17
      %p166 = scmp.lt.s32.totalorder %s17, 3
      %p167 = pnand %p165, %p166
      %p168 = pneg %p167
      // Predicated region
      $region25: #{tpu_custom_call.1} parent=5 // pred_check
        _
      $region26: #{tpu_custom_call.1} parent=5 // pred_check_branch
        %170 = sbr.rel (%p167) target = $region28
      $region27: #{tpu_custom_call.1} parent=5 // pred_region
        %s171 = ssub.s32 %s17, 1
        // Predicated region
        $region29: #{tpu_custom_call.1} parent=27 // pred_check
          %p172 = pneg %p38
        $region30: #{tpu_custom_call.1} parent=27 // pred_check_branch
          %174 = sbr.rel (%p172) target = $region32
        $region31: #{tpu_custom_call.1} parent=27 // pred_region
          %175 = dma.done [#allocation3], 512
        $region32: #{tpu_custom_call.1} parent=27 // pred_fallthru
          _
        %s176 = sand.u32 %s51, 1
        %s177 = scalar_lea.sflag [#allocation6], %s176
        %s178 = sand.u32 %s51, 1
        %s179 = smul.addr %s178, 8
        %s180 = scalar_lea.vmem [#allocation5], %s179
        // Predicated region
        $region33: #{tpu_custom_call.1} parent=27 // pred_check
          %p181 = pneg %p64
        $region34: #{tpu_custom_call.1} parent=27 // pred_check_branch
          %183 = sbr.rel (%p181) target = $region36
        $region35: #{tpu_custom_call.1} parent=27 // pred_region
          %184 = dma.done %s177, 128
        $region36: #{tpu_custom_call.1} parent=27 // pred_fallthru
          _
        %p185 = pneg %p38
        %p186 = pneg %p35
        %s187 = sand.u32 %s51, 1
        %s188 = scalar_lea.sflag [#allocation6], %s187
        %s189 = sand.u32 %s51, 1
        %s190 = smul.addr %s189, 8
        %s191 = scalar_lea.vmem [#allocation5], %s190
        %p192 = pneg %p64
        %p193 = pneg %p61
        %p194 = pneg %p90
        %p195 = pneg %p87
        %p196 = scmp.lt.s32.totalorder %s22, 1
        %s197 = scalar_select %p196, %s22, 1
        %s198 = smul.addr %s197, 8
        %s199 = smul.addr %s198, 4
        %s200 = scalar_lea.vmem %s2, %s199
        %p201 = pneg %p116
        %p202 = pneg %p113
        %s203 = sand.u32 %s103, 1
        %s204 = scalar_lea.sflag [#allocation4], %s203
        %s205 = sand.u32 %s103, 1
        %s206 = scalar_lea.vmem [#allocation7], %s205
        %p207 = scmp.lt.s32.totalorder %s22, 1
        %s208 = scalar_select %p207, %s22, 1
        %s209 = smul.addr %s208, 8
        %s210 = smul.addr %s209, 4
        %s211 = scalar_lea.vmem %s2, %s210
        %v212 = vld [vmem:[#allocation2] sm:$0x77]
        %v213 = vld [vmem:[#allocation2 + $0x8] sm:$0x77]
        %v214 = vld [vmem:[#allocation2 + $0x10] sm:$0x77]
        %v215 = vld [vmem:[#allocation2 + $0x18] sm:$0x77]
        %v216 = vld [vmem:[%s180] sm:$0xff]
        %v217 = vmul.f32 %v216, 100.0
        %v218 = vxor.u32 %v217, 2147483648
        %v219 = vmul.f32 %v218, 1.442695
        %v220 = vpow.pop %v219
        %v221 = vadd.f32 %v220, 1.0
        %v222 = vrcp.pop %v221
        %v223 = vmul.f32 1.0, %v222
        %v225 = vlaneseq
        %v226 = vshrl.u32 %v225, 7
        %v227 = vsub.s32 0, %v226
        %v228 = vrot.slane %v223, %v227
        %v229 = vlaneseq
        %v230 = vshrl.u32 %v229, 7
        %v231 = vsub.s32 1, %v230
        %v232 = vrot.slane %v223, %v231
        %v233 = vlaneseq
        %v234 = vshrl.u32 %v233, 7
        %v235 = vsub.s32 2, %v234
        %v236 = vrot.slane %v223, %v235
        %v237 = vlaneseq
        %v238 = vshrl.u32 %v237, 7
        %v239 = vsub.s32 3, %v238
        %v240 = vrot.slane %v223, %v239
        %v241 = vlaneseq
        %v242 = vshrl.u32 %v241, 7
        %v243 = vsub.s32 4, %v242
        %v244 = vrot.slane %v223, %v243
        %v245 = vlaneseq
        %v246 = vshrl.u32 %v245, 7
        %v247 = vsub.s32 5, %v246
        %v248 = vrot.slane %v223, %v247
        %v249 = vlaneseq
        %v250 = vshrl.u32 %v249, 7
        %v251 = vsub.s32 6, %v250
        %v252 = vrot.slane %v223, %v251
        %v253 = vlaneseq
        %v254 = vshrl.u32 %v253, 7
        %v255 = vsub.s32 7, %v254
        %v256 = vrot.slane %v223, %v255
        %v257 = vcombine.low %v228, %v232
        %v258 = vcombine.low %v236, %v240
        %v259 = vcombine.low %v244, %v248
        %v260 = vcombine.low %v252, %v256
        %v265 = vmul.f32 %v212, %v257
        %v266 = vmul.f32 %v213, %v258
        %v267 = vmul.f32 %v214, %v259
        %v268 = vmul.f32 %v215, %v260
        %269 = vst [vmem:[%s211] sm:$0x77] %v265
        %270 = vst [vmem:[%s211 + $0x8] sm:$0x77] %v266
        %271 = vst [vmem:[%s211 + $0x10] sm:$0x77] %v267
        %272 = vst [vmem:[%s211 + $0x18] sm:$0x77] %v268
        %vm273 = vcmp.gt.f32.partialorder %v216, 0.5
        %v274 = vsel %vm273, 1, 0
        %v275 = vcvt.s32.f32 %v274
        %v277 = vlaneseq
        %v278 = vshrl.u32 %v277, 7
        %v279 = vsub.s32 0, %v278
        %v280 = vrot.slane %v275, %v279
        %v281 = vlaneseq
        %v282 = vshrl.u32 %v281, 7
        %v283 = vsub.s32 1, %v282
        %v284 = vrot.slane %v275, %v283
        %v285 = vlaneseq
        %v286 = vshrl.u32 %v285, 7
        %v287 = vsub.s32 2, %v286
        %v288 = vrot.slane %v275, %v287
        %v289 = vlaneseq
        %v290 = vshrl.u32 %v289, 7
        %v291 = vsub.s32 3, %v290
        %v292 = vrot.slane %v275, %v291
        %v293 = vlaneseq
        %v294 = vshrl.u32 %v293, 7
        %v295 = vsub.s32 4, %v294
        %v296 = vrot.slane %v275, %v295
        %v297 = vlaneseq
        %v298 = vshrl.u32 %v297, 7
        %v299 = vsub.s32 5, %v298
        %v300 = vrot.slane %v275, %v299
        %v301 = vlaneseq
        %v302 = vshrl.u32 %v301, 7
        %v303 = vsub.s32 6, %v302
        %v304 = vrot.slane %v275, %v303
        %v305 = vlaneseq
        %v306 = vshrl.u32 %v305, 7
        %v307 = vsub.s32 7, %v306
        %v308 = vrot.slane %v275, %v307
        %vm317 = vcmask 1040384
        %v318 = vsel %vm317, %v280, 0.0
        %v319 = vsel %vm317, %v284, 0.0
        %v320 = vadd.f32 %v318, %v319
        %v321 = vsel %vm317, %v288, 0.0
        %v322 = vadd.f32 %v320, %v321
        %v323 = vsel %vm317, %v292, 0.0
        %v324 = vadd.f32 %v322, %v323
        %v325 = vsel %vm317, %v296, 0.0
        %v326 = vadd.f32 %v324, %v325
        %v327 = vsel %vm317, %v300, 0.0
        %v328 = vadd.f32 %v326, %v327
        %v329 = vsel %vm317, %v304, 0.0
        %v330 = vadd.f32 %v328, %v329
        %v331 = vsel %vm317, %v308, 0.0
        %v332 = vadd.f32 %v330, %v331
        %333 = vadd.xlane.f32.xlu0 %v332
        %v334 = vpop.xlane.xlu0 %333
        %v335 = vrot.slane %v334, 4
        %v336 = vadd.f32 %v334, %v335
        %v337 = vrot.slane %v336, 2
        %v338 = vadd.f32 %v336, %v337
        %v339 = vrot.slane %v338, 1
        %v340 = vadd.f32 %v338, %v339
        %s341 = vtos %v340
        %v342 = vstv %s341
        %343 = vst [vmem:[%s206] sm:$0x1] %v342
        %p344 = scmp.lt.s32.totalorder %s22, 1
        %s345 = scalar_select %p344, %s22, 1
        %s346 = smul.addr %s345, 8
        %s347 = smul.addr %s346, 4
        %s348 = scalar_lea.vmem %s2, %s347
        %s349 = sand.u32 %s103, 1
        %s350 = scalar_lea.sflag [#allocation4], %s349
        %s351 = sand.u32 %s103, 1
        %s352 = scalar_lea.vmem [#allocation7], %s351
        // Predicated region
        $region37: #{tpu_custom_call.1} parent=27 // pred_check
          %p353 = pneg %p87
        $region38: #{tpu_custom_call.1} parent=27 // pred_check_branch
          %355 = sbr.rel (%p353) target = $region40
        $region39: #{tpu_custom_call.1} parent=27 // pred_region
          _
        $region40: #{tpu_custom_call.1} parent=27 // pred_fallthru
          _
        // Predicated region
        $region41: #{tpu_custom_call.1} parent=27 // pred_check
          %p356 = pneg %p113
        $region42: #{tpu_custom_call.1} parent=27 // pred_check_branch
          %358 = sbr.rel (%p356) target = $region44
        $region43: #{tpu_custom_call.1} parent=27 // pred_region
          %s360 = ssub.s32 16, 16
          %361 = vsyncadd %s350, %s360
          %s362 = smul.addr %s22, 16
          %s363 = scalar_lea.hbm %s3, %s362
          %s365 = sshll.u32 %s352, 4
          %s366 = int_to_ptr.vmem [resolvable:$true] %s365
          %368 = dma.vmem_to_hbm [thread:$0]  %s366, 16, %s363, %s350
        $region44: #{tpu_custom_call.1} parent=27 // pred_fallthru
          _
      $region28: #{tpu_custom_call.1} parent=5 // pred_fallthru
        _
      %p369 = scmp.le.s32.totalorder 2, %s17
      // Predicated region
      $region45: #{tpu_custom_call.1} parent=5 // pred_check
        %p370 = pneg %p369
      $region46: #{tpu_custom_call.1} parent=5 // pred_check_branch
        %372 = sbr.rel (%p370) target = $region48
      $region47: #{tpu_custom_call.1} parent=5 // pred_region
        %s373 = ssub.s32 %s17, 2
        // Predicated region
        $region49: #{tpu_custom_call.1} parent=47 // pred_check
          %p374 = pneg %p93
        $region50: #{tpu_custom_call.1} parent=47 // pred_check_branch
          %376 = sbr.rel (%p374) target = $region52
        $region51: #{tpu_custom_call.1} parent=47 // pred_region
          %p377 = scmp.lt.s32.totalorder %s23, 1
          %s378 = scalar_select %p377, %s23, 1
          %s379 = smul.addr %s378, 8
          %s380 = smul.addr %s379, 4
          %s381 = scalar_lea.vmem %s2, %s380
        $region52: #{tpu_custom_call.1} parent=47 // pred_fallthru
          _
        // Predicated region
        $region53: #{tpu_custom_call.1} parent=47 // pred_check
          %p382 = pneg %p119
        $region54: #{tpu_custom_call.1} parent=47 // pred_check_branch
          %384 = sbr.rel (%p382) target = $region56
        $region55: #{tpu_custom_call.1} parent=47 // pred_region
          %s385 = sand.u32 %s104, 1
          %s386 = scalar_lea.sflag [#allocation4], %s385
          %s387 = sand.u32 %s104, 1
          %s388 = scalar_lea.vmem [#allocation7], %s387
          %389 = dma.done %s386, 16
        $region56: #{tpu_custom_call.1} parent=47 // pred_fallthru
          _
      $region48: #{tpu_custom_call.1} parent=5 // pred_fallthru
        _
    $region6: #{tpu_custom_call.1} parent=1 // loop_footer
      %s21 = sadd.s32 1, %s17
    $region7: #{tpu_custom_call.1} parent=1 // loop_footer_branch
      %16 = sbr.rel target = $region3
    $region8: #{tpu_custom_call.1} parent=1 // loop_exit
      _
    %390 = vsyncpa [#allocation3], 1
    %s391 = scalar_lea.sflag [#allocation3], 1
    %392 = vsyncpa %s391, 1
    %393 = vsyncpa [#allocation6], 1
    %s394 = scalar_lea.sflag [#allocation6], 1
    %395 = vsyncpa %s394, 1
    %396 = vsyncpa [#allocation4], 1
    %s397 = scalar_lea.sflag [#allocation4], 1
    %398 = vsyncpa %s397, 1

</llo_original>
